<compile_context>
chip_gen: v7x
topology: tpu7x:2x2x1
jax: 0.10.0
libtpu: 0.0.40
codegen_flags: <defaults>
</compile_context>

<pallas_src>
import functools

import jax
import jax.numpy as jnp
from jax.experimental import pallas as pl
from jax.experimental.pallas import tpu as pltpu

_LANES = 128
_SUBLANES = 8
_TARGET_STEP_BYTES = 4 << 20     # ~4 MiB of input HBM traffic per grid step
_MAX_TILE_ROWS = 8192
_PALLAS_MIN_ELEMS = 1 << 18      # below this, XLA's fused reduction wins
_VMEM_LIMIT_BYTES = 32 << 20     # >= actual use (~8 MiB), <= every chip's VMEM


def _round_up(x, m):
    return ((x + m - 1) // m) * m


def _num_tensorcores():
    """Best-effort TensorCore count per chip (2 on v7x, 1 on v5e/v6e)."""
    try:
        info = pltpu.get_tpu_info()
        for name in ("num_tensorcores", "tensorcores_per_chip", "num_cores",
                     "cores_per_chip", "core_count"):
            v = getattr(info, name, None)
            if isinstance(v, int) and v > 0:
                return v
    except Exception:
        pass
    try:
        v = getattr(jax.devices()[0], "num_cores", None)
        if isinstance(v, int) and v > 0:
            return v
    except Exception:
        pass
    return 1


def _row_alignment(*dtypes):
    # Sublane-packing alignment: 8 rows for 4-byte, 16 for 2-byte, 32 for 1-byte.
    return max(max(8, 32 // jnp.dtype(dt).itemsize) for dt in dtypes)


def _pick_tile_rows(rows, pred_dtype, gt_dtype):
    bytes_per_row = _LANES * (jnp.dtype(pred_dtype).itemsize +
                              jnp.dtype(gt_dtype).itemsize)
    align = _row_alignment(pred_dtype, gt_dtype)
    target = _TARGET_STEP_BYTES // bytes_per_row
    target = max(align, (target // align) * align)
    target = min(target, _MAX_TILE_ROWS)
    return min(target, _round_up(rows, align))


def _mse_partial_kernel(pred_ref, gt_ref, out_ref, acc_ref, *, rows_total):
    """Accumulate sum((pred - gt)^2) over this core's row tiles."""
    c = pl.program_id(0)            # core / parallel axis
    j = pl.program_id(1)            # row-tile (reduction) axis
    tile_rows = pred_ref.shape[0]
    tiles_per_core = pl.num_programs(1)

    @pl.when(j == 0)
    def _():
        acc_ref[...] = jnp.zeros_like(acc_ref)

    base = (c * tiles_per_core + j) * tile_rows
    is_edge = base + tile_rows > rows_total

    @pl.when(jnp.logical_not(is_edge))
    def _():
        # Common path: no masking work at all.
        d = pred_ref[...].astype(jnp.float32) - gt_ref[...].astype(jnp.float32)
        acc_ref[...] += jnp.sum((d * d).reshape(-1, _SUBLANES, _LANES), axis=0)

    @pl.when(is_edge)
    def _():
        # Last / clamped tiles: rows past the true array hold garbage or
        # duplicated data.  Mask the diff BEFORE squaring so NaN/Inf from
        # stale VMEM can never reach the sum.
        d = pred_ref[...].astype(jnp.float32) - gt_ref[...].astype(jnp.float32)
        row_idx = base + jax.lax.broadcasted_iota(jnp.int32, (tile_rows, 1), 0)
        d = jnp.where(row_idx < rows_total, d, 0.0)
        acc_ref[...] += jnp.sum((d * d).reshape(-1, _SUBLANES, _LANES), axis=0)

    @pl.when(j == pl.num_programs(1) - 1)
    def _():
        # Single cross-lane/sublane reduction per core, over one vreg.
        out_ref[...] = jnp.sum(acc_ref[...], axis=(0, 1), keepdims=True)


def _mse_loss_pallas(pred, gt, n):
    pred_flat = pred.reshape(-1)
    gt_flat = gt.reshape(-1)

    lane_pad = (-n) % _LANES
    if lane_pad:
        # TODO(synk): lane-ragged n (n % 128 != 0) still pays one padded HBM
        # copy per input; a true zero-copy path would need manual DMA from a
        # 1-D pl.ANY ref.  Padding with zeros is correctness-neutral (diff of
        # zeros is 0; the mean divides by the true n).
        pred_flat = jnp.pad(pred_flat, (0, lane_pad))
        gt_flat = jnp.pad(gt_flat, (0, lane_pad))

    rows = pred_flat.shape[0] // _LANES
    pred2d = pred_flat.reshape(rows, _LANES)   # free reshape (contiguous)
    gt2d = gt_flat.reshape(rows, _LANES)

    tile_rows = _pick_tile_rows(rows, pred.dtype, gt.dtype)
    num_row_tiles = pl.cdiv(rows, tile_rows)
    num_cores = _num_tensorcores()
    if num_row_tiles < num_cores:
        num_cores = 1
    tiles_per_core = pl.cdiv(num_row_tiles, num_cores)

    def in_map(c, j):
        # Clamp to a valid block; the kernel masks duplicated / ragged rows.
        return (jnp.minimum(c * tiles_per_core + j, num_row_tiles - 1), 0)

    kernel = functools.partial(_mse_partial_kernel, rows_total=rows)

    in_bytes = rows * _LANES * (jnp.dtype(pred.dtype).itemsize +
                                jnp.dtype(gt.dtype).itemsize)
    cost = pl.CostEstimate(flops=3 * n, transcendentals=0,
                           bytes_accessed=in_bytes + num_cores * 4)

    partial_sums = pl.pallas_call(
        kernel,
        out_shape=jax.ShapeDtypeStruct((num_cores, 1), jnp.float32),
        grid_spec=pltpu.PrefetchScalarGridSpec(
            num_scalar_prefetch=0,
            grid=(num_cores, tiles_per_core),
            in_specs=[
                pl.BlockSpec((tile_rows, _LANES), in_map),
                pl.BlockSpec((tile_rows, _LANES), in_map),
            ],
            out_specs=pl.BlockSpec((1, 1), lambda c, j: (c, 0)),
            scratch_shapes=[pltpu.VMEM((_SUBLANES, _LANES), jnp.float32)],
        ),
        compiler_params=pltpu.CompilerParams(
            dimension_semantics=("parallel", "arbitrary"),
            vmem_limit_bytes=_VMEM_LIMIT_BYTES,
        ),
        cost_estimate=cost,
    )(pred2d, gt2d)

    return jnp.sum(partial_sums) * (1.0 / float(n))


def mse_loss(params, gt_params, *, use_pallas=None):
    """Pallas equivalent of MSE_Loss.forward(params, gt_params)."""
    # torch's .squeeze(-1): drop the trailing dim only if it is 1.
    pred = params[..., 0] if params.shape[-1] == 1 else params
    assert pred.shape == gt_params.shape, (pred.shape, gt_params.shape)

    n = pred.size
    if use_pallas is None:
        use_pallas = n >= _PALLAS_MIN_ELEMS
    if n == 0 or not use_pallas:
        # Tiny inputs: pallas_call launch overhead dominates; XLA's fused
        # reduction is faster.
        d = pred.astype(jnp.float32) - gt_params.astype(jnp.float32)
        return jnp.mean(d * d)

    return _mse_loss_pallas(pred, gt_params, n)


def _ref_mse(params, gt_params):
    pred = params[..., 0] if params.shape[-1] == 1 else params
    d = pred.astype(jnp.float32) - gt_params.astype(jnp.float32)
    return jnp.mean(d * d)


if __name__ == "__main__":
    key = jax.random.PRNGKey(0)
    k1, k2, k3, k4, k5, k6, k7, k8 = jax.random.split(key, 8)

    # 1) Module-like small shapes (batch=2, curves=4, params=16, trailing 1):
    #    auto-dispatch takes the plain-JAX fast path.
    p_small = jax.random.normal(k1, (2, 4, 16, 1), dtype=jnp.float32)
    g_small = jax.random.normal(k2, (2, 4, 16), dtype=jnp.float32)
    loss_small = jax.block_until_ready(mse_loss(p_small, g_small))
    ref_small = _ref_mse(p_small, g_small)
    assert jnp.allclose(loss_small, ref_small, rtol=1e-6, atol=1e-6), (
        loss_small, ref_small)

    # 2) Same small case forced through the Pallas kernel (single ragged tile,
    #    edge-masking path).
    loss_small_pk = jax.block_until_ready(
        mse_loss(p_small, g_small, use_pallas=True))
    assert jnp.allclose(loss_small_pk, ref_small, rtol=1e-6, atol=1e-6), (
        loss_small_pk, ref_small)

    # 3) Lane-ragged size (n % 128 != 0) forced through Pallas.
    p_rag = jax.random.normal(k3, (5, 7, 33, 1), dtype=jnp.float32)
    g_rag = jax.random.normal(k4, (5, 7, 33), dtype=jnp.float32)
    loss_rag = jax.block_until_ready(mse_loss(p_rag, g_rag, use_pallas=True))
    ref_rag = _ref_mse(p_rag, g_rag)
    assert jnp.allclose(loss_rag, ref_rag, rtol=1e-6, atol=1e-6), (
        loss_rag, ref_rag)

    # 4) Larger f32 case (524288 elems): auto-dispatches to the Pallas kernel.
    p_big = jax.random.normal(k5, (8, 64, 1024, 1), dtype=jnp.float32)
    g_big = jax.random.normal(k6, (8, 64, 1024), dtype=jnp.float32)
    loss_big = jax.block_until_ready(mse_loss(p_big, g_big))
    ref_big = _ref_mse(p_big, g_big)
    assert jnp.allclose(loss_big, ref_big, rtol=1e-5, atol=1e-6), (
        loss_big, ref_big)

    # 5) bf16 inputs passed in native dtype (cast to f32 inside the kernel;
    #    tile_rows doubles automatically to keep bytes/step constant).
    p_bf = jax.random.normal(k7, (8, 64, 1024, 1), dtype=jnp.bfloat16)
    g_bf = jax.random.normal(k8, (8, 64, 1024), dtype=jnp.bfloat16)
    loss_bf = jax.block_until_ready(mse_loss(p_bf, g_bf))
    ref_bf = _ref_mse(p_bf, g_bf)
    assert jnp.allclose(loss_bf, ref_bf, rtol=1e-5, atol=1e-6), (
        loss_bf, ref_bf)

    print("KERNEL_OK")
</pallas_src>

<mosaic_0001>
module attributes {stable_mosaic.version = 11 : i64} {
  func.func @_mse_partial_kernel(%arg0: i32, %arg1: i32, %arg2: memref<8x128xf32, #tpu.memory_space<vmem>>, %arg3: memref<8x128xf32, #tpu.memory_space<vmem>>, %arg4: memref<1x1xf32, #tpu.memory_space<vmem>>, %arg5: memref<8x128xf32, #tpu.memory_space<vmem>>) attributes {dimension_semantics = [#tpu.dimension_semantics<parallel>, #tpu.dimension_semantics<arbitrary>], iteration_bounds = array<i64: 1, 1>, scalar_prefetch = 0 : i64, scratch_operands = 1 : i64, tpu.core_type = #tpu.core_type<tc>, window_params = [{transform_indices = @transform_0, window_bounds = array<i64: 8, 128>}, {transform_indices = @transform_1, window_bounds = array<i64: 8, 128>}, {transform_indices = @transform_2, window_bounds = array<i64: 1, 1>}]} {
    %c0_i32 = arith.constant 0 : i32
    %0 = arith.cmpi eq, %arg1, %c0_i32 : i32
    %1 = arith.extui %0 : i1 to i32
    %c0_i32_0 = arith.constant 0 : i32
    %2 = arith.cmpi ne, %1, %c0_i32_0 : i32
    scf.if %2 {
      %cst = arith.constant 0.000000e+00 : f32
      %16 = vector.broadcast %cst : f32 to vector<8x128xf32>
      %c0 = arith.constant 0 : index
      %c0_7 = arith.constant 0 : index
      %17 = vector.load %arg5[%c0, %c0_7] : memref<8x128xf32, #tpu.memory_space<vmem>>, vector<8x128xf32>
      tpu.vector_store %arg5[%c0, %c0_7], %16 {strides = array<i32>} : memref<8x128xf32, #tpu.memory_space<vmem>>, vector<8x128xf32>,
    } else {
    }
    %c1_i32 = arith.constant 1 : i32
    %3 = arith.muli %arg0, %c1_i32 : i32
    %4 = arith.addi %3, %arg1 : i32
    %c8_i32 = arith.constant 8 : i32
    %5 = arith.muli %4, %c8_i32 : i32
    %c8_i32_1 = arith.constant 8 : i32
    %6 = arith.addi %5, %c8_i32_1 : i32
    %c1_i32_2 = arith.constant 1 : i32
    %7 = arith.cmpi sgt, %6, %c1_i32_2 : i32
    %true = arith.constant true
    %8 = arith.xori %7, %true : i1
    %9 = arith.extui %8 : i1 to i32
    %c0_i32_3 = arith.constant 0 : i32
    %10 = arith.cmpi ne, %9, %c0_i32_3 : i32
    scf.if %10 {
      %c0 = arith.constant 0 : index
      %c0_7 = arith.constant 0 : index
      %16 = vector.load %arg2[%c0, %c0_7] : memref<8x128xf32, #tpu.memory_space<vmem>>, vector<8x128xf32>
      %c0_8 = arith.constant 0 : index
      %c0_9 = arith.constant 0 : index
      %17 = vector.load %arg3[%c0_8, %c0_9] : memref<8x128xf32, #tpu.memory_space<vmem>>, vector<8x128xf32>
      %18 = arith.subf %16, %17 : vector<8x128xf32>
      %c0_10 = arith.constant 0 : index
      %c0_11 = arith.constant 0 : index
      %19 = vector.load %arg5[%c0_10, %c0_11] : memref<8x128xf32, #tpu.memory_space<vmem>>, vector<8x128xf32>
      %20 = arith.mulf %18, %18 : vector<8x128xf32>
      %21 = vector.shape_cast %20 : vector<8x128xf32> to vector<1x8x128xf32>
      %cst = arith.constant dense<0.000000e+00> : vector<8x128xf32>
      %22 = vector.multi_reduction <add>, %21, %cst [0] : vector<1x8x128xf32> to vector<8x128xf32>
      %23 = arith.addf %19, %22 : vector<8x128xf32>
      %c0_12 = arith.constant 0 : index
      %c0_13 = arith.constant 0 : index
      %24 = vector.load %arg5[%c0_12, %c0_13] : memref<8x128xf32, #tpu.memory_space<vmem>>, vector<8x128xf32>
      tpu.vector_store %arg5[%c0_12, %c0_13], %23 {strides = array<i32>} : memref<8x128xf32, #tpu.memory_space<vmem>>, vector<8x128xf32>,
    } else {
    }
    %11 = arith.extui %7 : i1 to i32
    %c0_i32_4 = arith.constant 0 : i32
    %12 = arith.cmpi ne, %11, %c0_i32_4 : i32
    scf.if %12 {
      %c0 = arith.constant 0 : index
      %c0_7 = arith.constant 0 : index
      %16 = vector.load %arg2[%c0, %c0_7] : memref<8x128xf32, #tpu.memory_space<vmem>>, vector<8x128xf32>
      %c0_8 = arith.constant 0 : index
      %c0_9 = arith.constant 0 : index
      %17 = vector.load %arg3[%c0_8, %c0_9] : memref<8x128xf32, #tpu.memory_space<vmem>>, vector<8x128xf32>
      %18 = arith.subf %16, %17 : vector<8x128xf32>
      %19 = tpu.iota {dimensions = array<i32: 0>} : vector<8x1xi32>
      %20 = vector.broadcast %5 : i32 to vector<8x1xi32>
      %21 = arith.addi %20, %19 : vector<8x1xi32>
      %c1_i32_10 = arith.constant 1 : i32
      %22 = vector.broadcast %c1_i32_10 : i32 to vector<8x1xi32>
      %23 = arith.cmpi slt, %21, %22 : vector<8x1xi32>
      %cst = arith.constant 0.000000e+00 : f32
      %24 = vector.shape_cast %23 : vector<8x1xi1> to vector<8x1xi1>
      %25 = vector.broadcast %24 : vector<8x1xi1> to vector<8x128xi1>
      %26 = vector.broadcast %cst : f32 to vector<8x128xf32>
      %27 = arith.select %25, %18, %26 : vector<8x128xi1>, vector<8x128xf32>
      %c0_11 = arith.constant 0 : index
      %c0_12 = arith.constant 0 : index
      %28 = vector.load %arg5[%c0_11, %c0_12] : memref<8x128xf32, #tpu.memory_space<vmem>>, vector<8x128xf32>
      %29 = arith.mulf %27, %27 : vector<8x128xf32>
      %30 = vector.shape_cast %29 : vector<8x128xf32> to vector<1x8x128xf32>
      %cst_13 = arith.constant dense<0.000000e+00> : vector<8x128xf32>
      %31 = vector.multi_reduction <add>, %30, %cst_13 [0] : vector<1x8x128xf32> to vector<8x128xf32>
      %32 = arith.addf %28, %31 : vector<8x128xf32>
      %c0_14 = arith.constant 0 : index
      %c0_15 = arith.constant 0 : index
      %33 = vector.load %arg5[%c0_14, %c0_15] : memref<8x128xf32, #tpu.memory_space<vmem>>, vector<8x128xf32>
      tpu.vector_store %arg5[%c0_14, %c0_15], %32 {strides = array<i32>} : memref<8x128xf32, #tpu.memory_space<vmem>>, vector<8x128xf32>,
    } else {
    }
    %c0_i32_5 = arith.constant 0 : i32
    %13 = arith.cmpi eq, %arg1, %c0_i32_5 : i32
    %14 = arith.extui %13 : i1 to i32
    %c0_i32_6 = arith.constant 0 : i32
    %15 = arith.cmpi ne, %14, %c0_i32_6 : i32
    scf.if %15 {
      %c0 = arith.constant 0 : index
      %c0_7 = arith.constant 0 : index
      %16 = vector.load %arg5[%c0, %c0_7] : memref<8x128xf32, #tpu.memory_space<vmem>>, vector<8x128xf32>
      %17 = vector.shape_cast %16 : vector<8x128xf32> to vector<1x8x128xf32>
      %cst = arith.constant dense<0.000000e+00> : vector<1xf32>
      %18 = vector.multi_reduction <add>, %17, %cst [1, 2] : vector<1x8x128xf32> to vector<1xf32>
      %19 = vector.shape_cast %18 : vector<1xf32> to vector<1x1x1xf32>
      %20 = vector.extract %19[0, 0, 0] : f32 from vector<1x1x1xf32>
      %21 = vector.broadcast %20 : f32 to vector<1x1xf32>
      %c0_8 = arith.constant 0 : index
      %c0_9 = arith.constant 0 : index
      %22 = vector.load %arg4[%c0_8, %c0_9] : memref<1x1xf32, #tpu.memory_space<vmem>>, vector<1x1xf32>
      tpu.vector_store %arg4[%c0_8, %c0_9], %21 {strides = array<i32>} : memref<1x1xf32, #tpu.memory_space<vmem>>, vector<1x1xf32>,
    } else {
    }
    return
  }
  func.func @transform_0(%arg0: i32, %arg1: i32) -> (i32, i32) {
    %c1_i32 = arith.constant 1 : i32
    %0 = arith.muli %arg0, %c1_i32 : i32
    %1 = arith.addi %0, %arg1 : i32
    %c0_i32 = arith.constant 0 : i32
    %2 = arith.minsi %1, %c0_i32 : i32
    %c0_i32_0 = arith.constant 0 : i32
    %c0_i32_1 = arith.constant 0 : i32
    return %2, %c0_i32_0 : i32, i32
  }
  func.func @transform_1(%arg0: i32, %arg1: i32) -> (i32, i32) {
    %c1_i32 = arith.constant 1 : i32
    %0 = arith.muli %arg0, %c1_i32 : i32
    %1 = arith.addi %0, %arg1 : i32
    %c0_i32 = arith.constant 0 : i32
    %2 = arith.minsi %1, %c0_i32 : i32
    %c0_i32_0 = arith.constant 0 : i32
    %c0_i32_1 = arith.constant 0 : i32
    return %2, %c0_i32_0 : i32, i32
  }
  func.func @transform_2(%arg0: i32, %arg1: i32) -> (i32, i32) {
    %c0_i32 = arith.constant 0 : i32
    %c0_i32_0 = arith.constant 0 : i32
    return %arg0, %c0_i32 : i32, i32
  }
}

</mosaic_0001>

<llo_original>
// kernel: tpu_custom_call.1
$region0: #{tpu_custom_call.1}
  #allocation0 [shape = 'u32[]', space=smem, size = 0x4, offset = 0x4, fixed_abs, tag = 'smem constant byte address 0x4 - core index']
  #allocation1 [shape = 'u32[144,128]{1,0:T(1,128)}', space=vmem, size = 0x12000, scoped, tag = 'internal scratch']
  #allocation2 [shape = 'f32[8,128]{1,0:T(8,128)}', space=vmem, size = 0x1000, scoped, tag = 'scratch operand']
  %s0 = inlined_call_operand.hbm [shape: f32[1,128], index: 0, kind: input, shape index: {}]
  %s1 = inlined_call_operand.vmem [shape: f32[1,128], index: 1, kind: input, shape index: {}]
  %s2 = inlined_call_operand.hbm [shape: f32[1,1], index: 2, kind: output, shape index: {}]
  %s3 = sld [smem:[#allocation0]]
  $region38: #{tpu_custom_call.1} parent=0
    _
  %s5 = ssub.s32 1, %s3
  %s6 = scalar_select 0, %s5, %s3
  $region1: #{tpu_custom_call.1} parent=0
    #allocation3 [shape = 'u8[4096]{0}', space=vmem, size = 0x1000, scoped, tag = 'input window, operand 0, single buffered']
    #allocation4 [shape = 's32[1]{0}', space=sflag, size = 0x4, scoped, tag = 'scoped memory for tpu_custom_call.1']
    #allocation5 [shape = 's32[1]{0}', space=sflag, size = 0x4, scoped, tag = 'scoped memory for tpu_custom_call.1']
    #allocation6 [shape = 'u8[512]{0}', space=vmem, size = 0x400, scoped, tag = 'output window, operand 0, single buffered']
    %7 = vsyncpa [#allocation4], 0
    %8 = vsyncpa [#allocation5], 0
    // Predicated region
    $region2: #{tpu_custom_call.1} parent=1 // pred_check
      _
    $region3: #{tpu_custom_call.1} parent=1 // pred_check_branch
      %10 = sbr.rel (0) target = $region5
    $region4: #{tpu_custom_call.1} parent=1 // pred_region
      %s11 = sadd.s32 0, 0
      %p12 = scmp.lt.s32.totalorder %s11, 0
      %s13 = scalar_select %p12, %s11, 0
      %s14 = smul.u32 8, %s13
      %s15 = ssub.s32 1, %s14
      %s16 = smul.u32 16, %s15
      %s18 = ssub.s32 128, %s16
      %19 = vsyncadd [#allocation4], %s18
      %p20 = scmp.ne.s32.totalorder 0, %s16
      %s21 = smul.addr %s14, 16
      %s22 = scalar_lea.hbm %s0, %s21
      %s23 = sshll.u32 [#allocation3], 4
      %s24 = int_to_ptr.vmem [resolvable:$true] %s23
      %s25 = sshll.u32 %s15, 4
      %29 = dma.hbm_to_vmem [thread:$0]  (%p20), %s22, %s25, %s24, [#allocation4], 16, 16, 1
    $region5: #{tpu_custom_call.1} parent=1 // pred_fallthru
      _
    // Predicated region
    $region6: #{tpu_custom_call.1} parent=1 // pred_check
      _
    $region7: #{tpu_custom_call.1} parent=1 // pred_check_branch
      %31 = sbr.rel (0) target = $region9
    $region8: #{tpu_custom_call.1} parent=1 // pred_region
      %s32 = sadd.s32 0, 0
      %p33 = scmp.lt.s32.totalorder %s32, 0
      %s34 = scalar_select %p33, %s32, 0
      %s35 = smul.u32 8, %s34
      %s36 = ssub.s32 1, %s35
      %s37 = smul.u32 16, %s36
      %p38 = scmp.lt.s32.totalorder %s35, 0
      %s39 = scalar_select %p38, %s35, 0
      %s40 = scalar_lea.vmem %s1, %s39
      %s41 = sadd.s32 0, 0
      %p42 = scmp.lt.s32.totalorder %s41, 0
      %s43 = scalar_select %p42, %s41, 0
      %s44 = smul.u32 8, %s43
      %s45 = ssub.s32 1, %s44
      %s46 = smul.u32 16, %s45
    $region9: #{tpu_custom_call.1} parent=1 // pred_fallthru
      _
    // Predicated region
    $region10: #{tpu_custom_call.1} parent=1 // pred_check
      _
    $region11: #{tpu_custom_call.1} parent=1 // pred_check_branch
      %48 = sbr.rel (0) target = $region13
    $region12: #{tpu_custom_call.1} parent=1 // pred_region
      %49 = dma.done [#allocation4], 128
    $region13: #{tpu_custom_call.1} parent=1 // pred_fallthru
      _
    %s50 = sadd.s32 0, 0
    %p51 = scmp.lt.s32.totalorder %s50, 0
    %s52 = scalar_select %p51, %s50, 0
    %s53 = smul.u32 8, %s52
    %s54 = ssub.s32 1, %s53
    %s55 = smul.u32 16, %s54
    %p56 = scmp.lt.s32.totalorder %s53, 0
    %s57 = scalar_select %p56, %s53, 0
    %s58 = scalar_lea.vmem %s1, %s57
    %s59 = sadd.s32 0, 0
    %p60 = scmp.lt.s32.totalorder %s59, 0
    %s61 = scalar_select %p60, %s59, 0
    %s62 = smul.u32 8, %s61
    %s63 = ssub.s32 1, %s62
    %s64 = smul.u32 16, %s63
    %s65 = sadd.s32 0, 0
    %p66 = scmp.lt.s32.totalorder %s65, 0
    %s67 = scalar_select %p66, %s65, 0
    %s68 = smul.u32 8, %s67
    %s69 = ssub.s32 1, %s68
    %s70 = smul.u32 16, %s69
    %p71 = scmp.lt.s32.totalorder %s68, 0
    %s72 = scalar_select %p71, %s68, 0
    %s73 = scalar_lea.vmem %s1, %s72
    %s74 = sadd.s32 0, 0
    %p75 = scmp.lt.s32.totalorder %s74, 0
    %s76 = scalar_select %p75, %s74, 0
    %s77 = smul.u32 8, %s76
    %s78 = ssub.s32 1, %s77
    %s79 = smul.u32 16, %s78
    %p80 = scmp.eq.s32.totalorder 0, 0
    // Predicated region
    $region14: #{tpu_custom_call.1} parent=1 // pred_check
      %p81 = pneg %p80
    $region15: #{tpu_custom_call.1} parent=1 // pred_check_branch
      %83 = sbr.rel (%p81) target = $region17
    $region16: #{tpu_custom_call.1} parent=1 // pred_region
      %84 = vst [vmem:[#allocation2] sm:$0xff] 0.0
    $region17: #{tpu_custom_call.1} parent=1 // pred_fallthru
      _
    %s85 = sadd.s32 0, 0
    %s86 = smul.u32 %s85, 8
    %s87 = sadd.s32 %s86, 8
    %p88 = scmp.gt.s32.totalorder %s87, 1
    %p89 = scmp.le.s32.totalorder %s87, 1
    // Predicated region
    $region18: #{tpu_custom_call.1} parent=1 // pred_check
      %p90 = pneg %p89
    $region19: #{tpu_custom_call.1} parent=1 // pred_check_branch
      %92 = sbr.rel (%p90) target = $region21
    $region20: #{tpu_custom_call.1} parent=1 // pred_region
      %v93 = vld [vmem:[#allocation3] sm:$0xff]
      %v94 = vld [vmem:[%s73] sm:$0xff]
      %v95 = vsub.f32 %v93, %v94
      %v96 = vld [vmem:[#allocation2] sm:$0xff]
      %v97 = vmul.f32 %v95, %v95
      %v98 = vadd.f32 %v97, 0.0
      %v99 = vadd.f32 %v96, %v98
      %100 = vst [vmem:[#allocation2] sm:$0xff] %v99
    $region21: #{tpu_custom_call.1} parent=1 // pred_fallthru
      _
    // Predicated region
    $region22: #{tpu_custom_call.1} parent=1 // pred_check
      %p101 = pneg %p88
    $region23: #{tpu_custom_call.1} parent=1 // pred_check_branch
      %103 = sbr.rel (%p101) target = $region25
    $region24: #{tpu_custom_call.1} parent=1 // pred_region
      %v104 = vld [vmem:[#allocation3] sm:$0xff]
      %v105 = vld [vmem:[%s73] sm:$0xff]
      %v106 = vsub.f32 %v104, %v105
      %v107 = vlaneseq
      %v108 = vshrl.u32 %v107, 7
      %v109 = vstv %s86
      %v110 = vadd.s32 %v109, %v108
      %vm111 = vcmp.lt.s32.totalorder %v110, 1
      %v112 = vsel %vm111, 1, 0
      %vm113 = vcmp.eq.s32.totalorder %v112, 1
      %v114 = vsel %vm113, %v106, 0.0
      %v115 = vld [vmem:[#allocation2] sm:$0xff]
      %v116 = vmul.f32 %v114, %v114
      %v117 = vadd.f32 %v116, 0.0
      %v118 = vadd.f32 %v115, %v117
      %119 = vst [vmem:[#allocation2] sm:$0xff] %v118
    $region25: #{tpu_custom_call.1} parent=1 // pred_fallthru
      _
    // Predicated region
    $region26: #{tpu_custom_call.1} parent=1 // pred_check
      %p120 = pneg %p80
    $region27: #{tpu_custom_call.1} parent=1 // pred_check_branch
      %122 = sbr.rel (%p120) target = $region29
    $region28: #{tpu_custom_call.1} parent=1 // pred_region
      %v123 = vld [vmem:[#allocation2] sm:$0xff]
      %124 = vadd.xlane.f32.xlu0 %v123
      %v125 = vpop.xlane.xlu0 %124
      %v126 = vrot.slane %v125, 4
      %v127 = vadd.f32 %v125, %v126
      %v128 = vrot.slane %v127, 2
      %v129 = vadd.f32 %v127, %v128
      %v130 = vrot.slane %v129, 1
      %v131 = vadd.f32 %v129, %v130
      %s132 = vtos %v131
      %v133 = vstv %s132
      %vm134 = vcmask 0
      %135 = vst.msk [vmem:[#allocation6] sm:$0x1] %vm134, %v133
    $region29: #{tpu_custom_call.1} parent=1 // pred_fallthru
      _
    // Predicated region
    $region30: #{tpu_custom_call.1} parent=1 // pred_check
      _
    $region31: #{tpu_custom_call.1} parent=1 // pred_check_branch
      %137 = sbr.rel (0) target = $region33
    $region32: #{tpu_custom_call.1} parent=1 // pred_region
      %s139 = ssub.s32 16, 16
      %140 = vsyncadd [#allocation5], %s139
      %s142 = sshll.u32 [#allocation6], 4
      %s143 = int_to_ptr.vmem [resolvable:$true] %s142
      %145 = dma.vmem_to_hbm [thread:$0]  %s143, 16, %s2, [#allocation5]
    $region33: #{tpu_custom_call.1} parent=1 // pred_fallthru
      _
    // Predicated region
    $region34: #{tpu_custom_call.1} parent=1 // pred_check
      _
    $region35: #{tpu_custom_call.1} parent=1 // pred_check_branch
      %147 = sbr.rel (0) target = $region37
    $region36: #{tpu_custom_call.1} parent=1 // pred_region
      %148 = dma.done [#allocation5], 16
    $region37: #{tpu_custom_call.1} parent=1 // pred_fallthru
      _
    %149 = vsyncpa [#allocation4], 1
    %150 = vsyncpa [#allocation5], 1

</llo_original>
